<compile_context>
chip_gen: v7x
topology: tpu7x:2x2x1
jax: 0.10.0
libtpu: 0.0.40
codegen_flags: <defaults>
</compile_context>

<pallas_src>
import jax
import jax.numpy as jnp
from jax.experimental import pallas as pl
from jax.experimental.pallas import tpu as pltpu


_MAX_TILE_BYTES = 8 * 1024 * 1024     # per-tile VMEM budget (2 in + 2 out bufs = 32 MiB)
_VMEM_LIMIT_BYTES = 48 * 1024 * 1024  # explicit limit: > v5e's 16 MiB default, < v7x 64 MiB phys
_LANE_CANDIDATES = (1024, 512, 256, 128)  # lane-dense widths (multiples of 128)


def _round_up(n, m):
    return ((n + m - 1) // m) * m


def _copy_kernel(x_ref, o_ref):
    # BaseModel defines no parameters and no transform: y = x.
    # Whole-tile copy (no in-kernel slicing/reshaping) keeps the store path
    # at full-width unmasked vst.
    o_ref[...] = x_ref[...]


def base_model_forward(x):
    """Pallas pass-through forward for the (abstract, parameter-free) BaseModel.

    Accepts any tensor, returns an identical tensor.  Lane-dense-compatible
    inputs are streamed through a tiled, pipelined VMEM copy kernel; ragged
    inputs take the zero-traffic identity fast path.
    """
    orig_shape = x.shape
    total = int(x.size)
    if total == 0:
        return x

    itemsize = x.dtype.itemsize
    # Sub-32-bit dtypes pack along sublanes: keep row tiles a multiple of
    # 8 (f32) / 16 (bf16) / 32 (int8).
    sublane_mult = max(8, 32 // itemsize)

    # Pick a lane width.  Prefer one that also yields a sublane-aligned row
    # count (no ragged block at all); otherwise take any width that divides
    # the element count (ragged last block is masked by Pallas).
    lane = None
    for w in _LANE_CANDIDATES:
        if total % w == 0 and (total // w) % sublane_mult == 0:
            lane = w
            break
    if lane is None:
        for w in _LANE_CANDIDATES:
            if total % w == 0:
                lane = w
                break
    if lane is None:
        # Element count not a multiple of 128: repacking lane-dense would need
        # a pad copy (a full extra HBM read+write pass) just to run an identity
        # kernel.  BaseModel's forward defines no transform, so the zero-HBM
        # identity wins outright.
        return x

    rows = total // lane
    # Contiguous reshape -> metadata-only (bitcast); no repack materialization,
    # no jnp.pad, and no post-kernel slice.
    x2d = x.reshape(rows, lane)

    # Row tiling: as large as the VMEM budget allows, sublane-aligned, but
    # split into >= 2 tiles whenever rows permit so v7x's two TensorCores both
    # drive HBM on the "parallel" grid axis.
    if rows <= sublane_mult:
        row_tile = rows  # full-extent block along rows (always legal)
    else:
        budget_rows = max(
            sublane_mult,
            (_MAX_TILE_BYTES // (lane * itemsize)) // sublane_mult * sublane_mult,
        )
        half_rows = _round_up(-(-rows // 2), sublane_mult)
        row_tile = max(sublane_mult, min(budget_rows, half_rows))
    num_tiles = -(-rows // row_tile)  # ragged last block -> masked writes

    out2d = pl.pallas_call(
        _copy_kernel,
        out_shape=jax.ShapeDtypeStruct((rows, lane), x.dtype),
        grid=(num_tiles,),
        in_specs=[pl.BlockSpec((row_tile, lane), lambda i: (i, 0))],
        out_specs=pl.BlockSpec((row_tile, lane), lambda i: (i, 0)),
        compiler_params=pltpu.CompilerParams(
            dimension_semantics=("parallel",),      # independent tiles -> megacore-shardable
            vmem_limit_bytes=_VMEM_LIMIT_BYTES,     # headroom on v5e/v6e/v7x
        ),
        cost_estimate=pl.CostEstimate(
            flops=0, transcendentals=0, bytes_accessed=2 * total * itemsize),
    )(x2d)

    # Contiguous reshape back -> bitcast, free.
    return out2d.reshape(orig_shape)


if __name__ == "__main__":
    key = jax.random.PRNGKey(0)

    # Small NCHW input consistent with a generic model input (single-tile path).
    x = jax.random.normal(key, (2, 4, 16, 16), dtype=jnp.float32)
    y = jax.block_until_ready(base_model_forward(x))
    assert y.shape == x.shape and y.dtype == x.dtype
    assert bool(jnp.array_equal(y, x))

    # Larger input exercising the multi-tile (>=2 grid steps) pipelined path.
    x2 = jax.random.normal(jax.random.PRNGKey(0), (8, 8, 32, 128), dtype=jnp.float32)
    y2 = jax.block_until_ready(base_model_forward(x2))
    assert bool(jnp.array_equal(y2, x2))

    # Ragged element count: identity fast path (no kernel, no HBM traffic).
    x3 = jax.random.normal(jax.random.PRNGKey(0), (3, 5, 7), dtype=jnp.float32)
    y3 = jax.block_until_ready(base_model_forward(x3))
    assert bool(jnp.array_equal(y3, x3))

    print("KERNEL_OK")
</pallas_src>

<mosaic_0001>
module attributes {stable_mosaic.version = 11 : i64} {
  func.func @_copy_kernel(%arg0: i32, %arg1: memref<8x256xf32, #tpu.memory_space<vmem>>, %arg2: memref<8x256xf32, #tpu.memory_space<vmem>>) attributes {dimension_semantics = [#tpu.dimension_semantics<parallel>], iteration_bounds = array<i64: 1>, scalar_prefetch = 0 : i64, scratch_operands = 0 : i64, tpu.core_type = #tpu.core_type<tc>, window_params = [{transform_indices = @transform_0, window_bounds = array<i64: 8, 256>}, {transform_indices = @transform_1, window_bounds = array<i64: 8, 256>}]} {
    %c0 = arith.constant 0 : index
    %c0_0 = arith.constant 0 : index
    %0 = vector.load %arg1[%c0, %c0_0] : memref<8x256xf32, #tpu.memory_space<vmem>>, vector<8x256xf32>
    %c0_1 = arith.constant 0 : index
    %c0_2 = arith.constant 0 : index
    %1 = vector.load %arg2[%c0_1, %c0_2] : memref<8x256xf32, #tpu.memory_space<vmem>>, vector<8x256xf32>
    tpu.vector_store %arg2[%c0_1, %c0_2], %0 {strides = array<i32>} : memref<8x256xf32, #tpu.memory_space<vmem>>, vector<8x256xf32>,
    return
  }
  func.func @transform_0(%arg0: i32) -> (i32, i32) {
    %c0_i32 = arith.constant 0 : i32
    %c0_i32_0 = arith.constant 0 : i32
    return %arg0, %c0_i32 : i32, i32
  }
  func.func @transform_1(%arg0: i32) -> (i32, i32) {
    %c0_i32 = arith.constant 0 : i32
    %c0_i32_0 = arith.constant 0 : i32
    return %arg0, %c0_i32 : i32, i32
  }
}

</mosaic_0001>

<llo_original>
// kernel: tpu_custom_call.1
$region0: #{tpu_custom_call.1}
  #allocation0 [shape = 'u32[]', space=smem, size = 0x4, offset = 0x4, fixed_abs, tag = 'smem constant byte address 0x4 - core index']
  #allocation1 [shape = 'u32[144,128]{1,0:T(1,128)}', space=vmem, size = 0x12000, scoped, tag = 'internal scratch']
  %s0 = inlined_call_operand.hbm [shape: f32[8,256], index: 0, kind: input, shape index: {}]
  %s1 = inlined_call_operand.hbm [shape: f32[8,256], index: 1, kind: output, shape index: {}]
  %s2 = sld [smem:[#allocation0]]
  $region18: #{tpu_custom_call.1} parent=0
    _
  %s4 = ssub.s32 1, %s2
  %s5 = scalar_select 0, %s4, %s2
  $region1: #{tpu_custom_call.1} parent=0
    #allocation2 [shape = 'u8[8192]{0}', space=vmem, size = 0x2000, scoped, tag = 'input window, operand 0, single buffered']
    #allocation3 [shape = 's32[1]{0}', space=sflag, size = 0x4, scoped, tag = 'scoped memory for tpu_custom_call.1']
    #allocation4 [shape = 's32[1]{0}', space=sflag, size = 0x4, scoped, tag = 'scoped memory for tpu_custom_call.1']
    #allocation5 [shape = 'u8[8192]{0}', space=vmem, size = 0x2000, scoped, tag = 'output window, operand 0, single buffered']
    %6 = vsyncpa [#allocation3], 0
    %7 = vsyncpa [#allocation4], 0
    // Predicated region
    $region2: #{tpu_custom_call.1} parent=1 // pred_check
      _
    $region3: #{tpu_custom_call.1} parent=1 // pred_check_branch
      %9 = sbr.rel (0) target = $region5
    $region4: #{tpu_custom_call.1} parent=1 // pred_region
      %s11 = ssub.s32 256, 256
      %12 = vsyncadd [#allocation3], %s11
      %s14 = sshll.u32 [#allocation2], 4
      %s15 = int_to_ptr.vmem [resolvable:$true] %s14
      %17 = dma.hbm_to_vmem [thread:$0]  %s0, 256, %s15, [#allocation3]
    $region5: #{tpu_custom_call.1} parent=1 // pred_fallthru
      _
    // Predicated region
    $region6: #{tpu_custom_call.1} parent=1 // pred_check
      _
    $region7: #{tpu_custom_call.1} parent=1 // pred_check_branch
      %19 = sbr.rel (0) target = $region9
    $region8: #{tpu_custom_call.1} parent=1 // pred_region
      %20 = dma.done [#allocation3], 256
    $region9: #{tpu_custom_call.1} parent=1 // pred_fallthru
      _
    %v21 = vld [vmem:[#allocation2] sm:$0xff]
    %v22 = vld [vmem:[#allocation2 + $0x8] sm:$0xff]
    %23 = vst [vmem:[#allocation5] sm:$0xff] %v21
    %24 = vst [vmem:[#allocation5 + $0x8] sm:$0xff] %v22
    // Predicated region
    $region10: #{tpu_custom_call.1} parent=1 // pred_check
      _
    $region11: #{tpu_custom_call.1} parent=1 // pred_check_branch
      %26 = sbr.rel (0) target = $region13
    $region12: #{tpu_custom_call.1} parent=1 // pred_region
      %s28 = ssub.s32 256, 256
      %29 = vsyncadd [#allocation4], %s28
      %s31 = sshll.u32 [#allocation5], 4
      %s32 = int_to_ptr.vmem [resolvable:$true] %s31
      %34 = dma.vmem_to_hbm [thread:$0]  %s32, 256, %s1, [#allocation4]
    $region13: #{tpu_custom_call.1} parent=1 // pred_fallthru
      _
    // Predicated region
    $region14: #{tpu_custom_call.1} parent=1 // pred_check
      _
    $region15: #{tpu_custom_call.1} parent=1 // pred_check_branch
      %36 = sbr.rel (0) target = $region17
    $region16: #{tpu_custom_call.1} parent=1 // pred_region
      %37 = dma.done [#allocation4], 256
    $region17: #{tpu_custom_call.1} parent=1 // pred_fallthru
      _
    %38 = vsyncpa [#allocation3], 1
    %39 = vsyncpa [#allocation4], 1

</llo_original>
